<compile_context>
chip_gen: v7x
topology: tpu7x:2x2x1
jax: 0.10.0
libtpu: 0.0.40
codegen_flags: <defaults>
</compile_context>

<pallas_src>
import functools
import math

import jax
import jax.numpy as jnp
import numpy as np
from jax.experimental import pallas as pl
from jax.experimental.pallas import tpu as pltpu


def _initial_params(num_rbf: int, soft_cutoff_upper: float):
    """Single source of truth mirroring rbf_emb._initial_params.

    Returns (start, step, beta); means[j] = start + j * step (torch.linspace).
    """
    start = math.exp(-float(soft_cutoff_upper))
    end = math.exp(-0.0)  # soft_cutoff_lower = 0
    step = (end - start) / (num_rbf - 1) if num_rbf > 1 else 0.0
    beta = (2.0 / num_rbf * (end - start)) ** (-2)
    return start, step, beta


def _rbf_kernel(d4_ref, eneg_ref, out_ref, *, rbf_pad, cutoff, cos_scale,
                sqrt_beta, mean_a, mean_b, ln_half):
    # d4_ref:  (rows, pack) f32 — `pack` edges packed per output row
    # eneg_ref:(pack, 128)  f32 — constant {0,-1} lane-group expansion matrix
    # out_ref: (rows, 128)       — lane-dense packed output slab
    rows = out_ref.shape[0]
    d4 = d4_ref[...]

    # --- lane-group expansion on the (otherwise idle) MXU --------------------
    #   neg_d[r, l] = -d4[r, l // rbf_pad]
    # lhs split into bf16-exact part + f32 residual keeps the expansion
    # f32-accurate even if the matmul path demotes operands to bf16.
    if d4.shape[1] == 1:
        neg_d = jnp.broadcast_to(-d4, (rows, 128))
    else:
        e = eneg_ref[...]
        d_hi = d4.astype(jnp.bfloat16).astype(jnp.float32)
        d_lo = d4 - d_hi
        neg_d = (jnp.dot(d_hi, e, preferred_element_type=jnp.float32)
                 + jnp.dot(d_lo, e, preferred_element_type=jnp.float32))

    # --- sqrt(beta)-scaled means generated from a lane iota (no input/DMA) ---
    lane = jax.lax.broadcasted_iota(jnp.int32, (1, 128), 1)
    j = (lane & (rbf_pad - 1)).astype(jnp.float32)   # rbf_pad is a power of two
    m_sb = mean_a + mean_b * j                       # (1, 128)

    # Soft cosine cutoff; cos is even, so cos(neg_d*s) == cos(d*s).  The 0.5
    # factor is folded into the RBF exponent below as ln(1/2).
    soft = jnp.cos(neg_d * cos_scale) + 1.0
    soft = jnp.where(neg_d > -cutoff, soft, 0.0)     # strict (d < cutoff) mask

    # RBF: 0.5 * exp(-beta * (exp(-d) - mean)^2), with sqrt(beta) folded into
    # both terms and the 0.5 folded into the exponent.
    t = jnp.exp(neg_d) * sqrt_beta - m_sb
    out_ref[...] = (soft * jnp.exp(ln_half - t * t)).astype(out_ref.dtype)


def rbf_emb_forward(dist, num_rbf, soft_cutoff_upper, *, block_edges=16384,
                    out_dtype=jnp.float32):
    """dist: (N,) -> (N, num_rbf), matching rbf_emb.forward."""
    assert 1 <= num_rbf <= 128, "TODO(synk): support num_rbf > 128"
    # Pad num_rbf to the next divisor of 128 (all divisors are powers of two);
    # the extra lanes are computed in-kernel and sliced off afterwards.
    rbf_pad = 1
    while rbf_pad < num_rbf:
        rbf_pad *= 2
    pack = 128 // rbf_pad
    n = dist.shape[0]

    start, step, beta = _initial_params(num_rbf, soft_cutoff_upper)
    sqrt_beta = math.sqrt(beta)
    cutoff = float(soft_cutoff_upper)

    # Constant expansion matrix: E_neg[g, l] = -1 iff l // rbf_pad == g.
    eneg = np.zeros((pack, 128), dtype=np.float32)
    for g in range(pack):
        eneg[g, g * rbf_pad:(g + 1) * rbf_pad] = -1.0
    eneg = jnp.asarray(eneg)

    # Tile sizing: large lane-dense tiles for HBM efficiency, shrunk for tiny
    # inputs.  Default 16384 edges -> 2 MiB output block (fits v7x's VMEM).
    rows = pl.cdiv(n, pack)
    block_rows = max(8, min(block_edges // pack, pl.cdiv(rows, 8) * 8))
    rows_pad = pl.cdiv(rows, block_rows) * block_rows
    n_pad = rows_pad * pack

    d = dist.astype(jnp.float32).reshape(-1)
    if n_pad != n:
        # Pad beyond the cutoff; padded entries yield zeros and are sliced off.
        d = jnp.pad(d, (0, n_pad - n), constant_values=cutoff + 1.0)
    d4 = d.reshape(rows_pad, pack)

    kernel = functools.partial(
        _rbf_kernel, rbf_pad=rbf_pad, cutoff=cutoff,
        cos_scale=math.pi / cutoff, sqrt_beta=sqrt_beta,
        mean_a=sqrt_beta * start, mean_b=sqrt_beta * step,
        ln_half=math.log(0.5))

    out_slab = pl.pallas_call(
        kernel,
        out_shape=jax.ShapeDtypeStruct((rows_pad, 128), out_dtype),
        grid_spec=pltpu.PrefetchScalarGridSpec(
            num_scalar_prefetch=0,
            grid=(rows_pad // block_rows,),
            in_specs=[
                pl.BlockSpec((block_rows, pack), lambda i: (i, 0)),  # packed dist
                pl.BlockSpec((pack, 128), lambda i: (0, 0)),          # expand mat
            ],
            out_specs=pl.BlockSpec((block_rows, 128), lambda i: (i, 0)),
        ),
        compiler_params=pltpu.CompilerParams(
            dimension_semantics=("parallel",),   # shards grid across v7x's 2 TCs
            vmem_limit_bytes=64 * 1024 * 1024),
    )(d4, eneg)

    # Free row-major reshape back to the module's layout; drop padded lanes/edges.
    return out_slab.reshape(n_pad, rbf_pad)[:n, :num_rbf]


def rbf_emb_reference(dist, num_rbf, soft_cutoff_upper):
    """Pure-JAX reference mirroring the PyTorch forward (shared params)."""
    start, step, beta = _initial_params(num_rbf, soft_cutoff_upper)
    means = start + step * jnp.arange(num_rbf, dtype=jnp.float32)
    d = dist[:, None].astype(jnp.float32)
    soft = 0.5 * (jnp.cos(d * math.pi / soft_cutoff_upper) + 1.0)
    soft = soft * (d < soft_cutoff_upper).astype(jnp.float32)
    return soft * jnp.exp(-beta * jnp.square(jnp.exp(-d) - means[None, :]))


if __name__ == "__main__":
    num_rbf = 32
    soft_cutoff_upper = 5.0
    n_edges = 200  # deliberately not a tile multiple -> exercises padding

    key = jax.random.PRNGKey(0)
    # distances in [0, 1.2*cutoff) so both sides of the cutoff are exercised
    dist = jax.random.uniform(key, (n_edges,), dtype=jnp.float32,
                              minval=0.0, maxval=1.2 * soft_cutoff_upper)

    out = rbf_emb_forward(dist, num_rbf, soft_cutoff_upper)
    out = jax.block_until_ready(out)
    ref = rbf_emb_reference(dist, num_rbf, soft_cutoff_upper)
    assert out.shape == (n_edges, num_rbf)
    assert jnp.allclose(out, ref, atol=1e-4, rtol=1e-4), (
        "mismatch vs reference: max abs err "
        f"{float(jnp.max(jnp.abs(out - ref)))}")

    # Also exercise a num_rbf that does NOT divide 128 (padded-lane fallback).
    out20 = jax.block_until_ready(rbf_emb_forward(dist, 20, soft_cutoff_upper))
    ref20 = rbf_emb_reference(dist, 20, soft_cutoff_upper)
    assert out20.shape == (n_edges, 20)
    assert jnp.allclose(out20, ref20, atol=1e-4, rtol=1e-4), "num_rbf=20 mismatch"

    print("KERNEL_OK")
</pallas_src>

<mosaic_0001>
module attributes {stable_mosaic.version = 11 : i64} {
  func.func @_rbf_kernel(%arg0: i32, %arg1: memref<56x4xf32, #tpu.memory_space<vmem>>, %arg2: memref<4x128xf32, #tpu.memory_space<vmem>>, %arg3: memref<56x128xf32, #tpu.memory_space<vmem>>) attributes {dimension_semantics = [#tpu.dimension_semantics<parallel>], iteration_bounds = array<i64: 1>, scalar_prefetch = 0 : i64, scratch_operands = 0 : i64, tpu.core_type = #tpu.core_type<tc>, window_params = [{transform_indices = @transform_0, window_bounds = array<i64: 56, 4>}, {pipeline_mode = #tpu.pipeline_mode<synchronous>, transform_indices = @transform_1, window_bounds = array<i64: 4, 128>}, {transform_indices = @transform_2, window_bounds = array<i64: 56, 128>}]} {
    %c0 = arith.constant 0 : index
    %c0_0 = arith.constant 0 : index
    %0 = vector.load %arg1[%c0, %c0_0] : memref<56x4xf32, #tpu.memory_space<vmem>>, vector<56x4xf32>
    %c0_1 = arith.constant 0 : index
    %c0_2 = arith.constant 0 : index
    %1 = vector.load %arg2[%c0_1, %c0_2] : memref<4x128xf32, #tpu.memory_space<vmem>>, vector<4x128xf32>
    %2 = arith.truncf %0 : vector<56x4xf32> to vector<56x4xbf16>
    %3 = arith.extf %2 : vector<56x4xbf16> to vector<56x4xf32>
    %4 = arith.subf %0, %3 : vector<56x4xf32>
    %cst = arith.constant dense<0.000000e+00> : vector<56x128xf32>
    %5 = tpu.matmul %3, %1, %cst {dimension_numbers = #tpu.dot_dimension_numbers<[1], [0], [0], [1], [0, 0, 1, 1], [], []>} : vector<56x4xf32>, vector<4x128xf32>, vector<56x128xf32> -> vector<56x128xf32>
    %cst_3 = arith.constant dense<0.000000e+00> : vector<56x128xf32>
    %6 = tpu.matmul %4, %1, %cst_3 {dimension_numbers = #tpu.dot_dimension_numbers<[1], [0], [0], [1], [0, 0, 1, 1], [], []>} : vector<56x4xf32>, vector<4x128xf32>, vector<56x128xf32> -> vector<56x128xf32>
    %7 = arith.addf %5, %6 : vector<56x128xf32>
    %8 = tpu.iota {dimensions = array<i32: 1>} : vector<1x128xi32>
    %c31_i32 = arith.constant 31 : i32
    %9 = vector.broadcast %c31_i32 : i32 to vector<1x128xi32>
    %10 = arith.andi %8, %9 : vector<1x128xi32>
    %11 = arith.sitofp %10 : vector<1x128xi32> to vector<1x128xf32>
    %cst_4 = arith.constant 5.161290e-01 : f32
    %12 = vector.broadcast %cst_4 : f32 to vector<1x128xf32>
    %13 = arith.mulf %12, %11 : vector<1x128xf32>
    %cst_5 = arith.constant 0.108538479 : f32
    %14 = vector.broadcast %cst_5 : f32 to vector<1x128xf32>
    %15 = arith.addf %14, %13 : vector<1x128xf32>
    %cst_6 = arith.constant 0.628318548 : f32
    %16 = vector.broadcast %cst_6 : f32 to vector<56x128xf32>
    %17 = arith.mulf %7, %16 : vector<56x128xf32>
    %18 = math.cos %17 : vector<56x128xf32>
    %cst_7 = arith.constant 1.000000e+00 : f32
    %19 = vector.broadcast %cst_7 : f32 to vector<56x128xf32>
    %20 = arith.addf %18, %19 : vector<56x128xf32>
    %cst_8 = arith.constant -5.000000e+00 : f32
    %21 = vector.broadcast %cst_8 : f32 to vector<56x128xf32>
    %22 = arith.cmpf ogt, %7, %21 : vector<56x128xf32>
    %cst_9 = arith.constant 0.000000e+00 : f32
    %23 = vector.broadcast %cst_9 : f32 to vector<56x128xf32>
    %24 = arith.select %22, %20, %23 : vector<56x128xi1>, vector<56x128xf32>
    %25 = math.exp %7 : vector<56x128xf32>
    %cst_10 = arith.constant 16.1085377 : f32
    %26 = vector.broadcast %cst_10 : f32 to vector<56x128xf32>
    %27 = arith.mulf %25, %26 : vector<56x128xf32>
    %28 = vector.broadcast %15 : vector<1x128xf32> to vector<56x128xf32>
    %29 = arith.subf %27, %28 : vector<56x128xf32>
    %30 = arith.mulf %29, %29 : vector<56x128xf32>
    %cst_11 = arith.constant -0.693147182 : f32
    %31 = vector.broadcast %cst_11 : f32 to vector<56x128xf32>
    %32 = arith.subf %31, %30 : vector<56x128xf32>
    %33 = math.exp %32 : vector<56x128xf32>
    %34 = arith.mulf %24, %33 : vector<56x128xf32>
    %c0_12 = arith.constant 0 : index
    %c0_13 = arith.constant 0 : index
    %35 = vector.load %arg3[%c0_12, %c0_13] : memref<56x128xf32, #tpu.memory_space<vmem>>, vector<56x128xf32>
    tpu.vector_store %arg3[%c0_12, %c0_13], %34 {strides = array<i32>} : memref<56x128xf32, #tpu.memory_space<vmem>>, vector<56x128xf32>,
    return
  }
  func.func @transform_0(%arg0: i32) -> (i32, i32) {
    %c0_i32 = arith.constant 0 : i32
    %c0_i32_0 = arith.constant 0 : i32
    return %arg0, %c0_i32 : i32, i32
  }
  func.func @transform_1(%arg0: i32) -> (i32, i32) {
    %c0_i32 = arith.constant 0 : i32
    %c0_i32_0 = arith.constant 0 : i32
    %c0_i32_1 = arith.constant 0 : i32
    return %c0_i32, %c0_i32_0 : i32, i32
  }
  func.func @transform_2(%arg0: i32) -> (i32, i32) {
    %c0_i32 = arith.constant 0 : i32
    %c0_i32_0 = arith.constant 0 : i32
    return %arg0, %c0_i32 : i32, i32
  }
}

</mosaic_0001>

<llo_original>
// kernel: tpu_custom_call.1
$region0: #{tpu_custom_call.1}
  #allocation0 [shape = 'u32[]', space=smem, size = 0x4, offset = 0x4, fixed_abs, tag = 'smem constant byte address 0x4 - core index']
  #allocation1 [shape = 'u32[144,128]{1,0:T(1,128)}', space=vmem, size = 0x12000, scoped, tag = 'internal scratch']
  %s0 = inlined_call_operand.hbm [shape: f32[56,4], index: 0, kind: input, shape index: {}]
  %s1 = inlined_call_operand.hbm [shape: f32[4,128], index: 1, kind: input, shape index: {}]
  %s2 = inlined_call_operand.hbm [shape: f32[56,128], index: 2, kind: output, shape index: {}]
  %s3 = sld [smem:[#allocation0]]
  $region26: #{tpu_custom_call.1} parent=0
    _
  %s5 = ssub.s32 1, %s3
  %s6 = scalar_select 0, %s5, %s3
  $region1: #{tpu_custom_call.1} parent=0
    #allocation2 [shape = 'u8[28672]{0}', space=vmem, size = 0x7000, scoped, tag = 'input window, operand 0, single buffered']
    #allocation3 [shape = 's32[1]{0}', space=sflag, size = 0x4, scoped, tag = 'scoped memory for tpu_custom_call.1']
    #allocation4 [shape = 's32[1]{0}', space=sflag, size = 0x4, scoped, tag = 'scoped memory for tpu_custom_call.1']
    #allocation5 [shape = 'u8[2048]{0}', space=vmem, size = 0x800, scoped, tag = 'input window, operand 1, single buffered']
    #allocation6 [shape = 's32[1]{0}', space=sflag, size = 0x4, scoped, tag = 'scoped memory for tpu_custom_call.1']
    #allocation7 [shape = 'u8[28672]{0}', space=vmem, size = 0x7000, scoped, tag = 'output window, operand 0, single buffered']
    %7 = vsyncpa [#allocation3], 0
    %8 = vsyncpa [#allocation6], 0
    %9 = vsyncpa [#allocation4], 0
    // Predicated region
    $region2: #{tpu_custom_call.1} parent=1 // pred_check
      _
    $region3: #{tpu_custom_call.1} parent=1 // pred_check_branch
      %11 = sbr.rel (0) target = $region5
    $region4: #{tpu_custom_call.1} parent=1 // pred_region
      %s13 = ssub.s32 896, 896
      %14 = vsyncadd [#allocation3], %s13
      %s15 = sshll.u32 [#allocation2], 4
      %s16 = int_to_ptr.vmem [resolvable:$true] %s15
      %21 = dma.hbm_to_vmem [thread:$0]  %s0, 896, %s16, [#allocation3], 128, 128, 8
    $region5: #{tpu_custom_call.1} parent=1 // pred_fallthru
      _
    // Predicated region
    $region6: #{tpu_custom_call.1} parent=1 // pred_check
      _
    $region7: #{tpu_custom_call.1} parent=1 // pred_check_branch
      %23 = sbr.rel (0) target = $region9
    $region8: #{tpu_custom_call.1} parent=1 // pred_region
      %s25 = ssub.s32 64, 64
      %26 = vsyncadd [#allocation6], %s25
      %s28 = sshll.u32 [#allocation5], 4
      %s29 = int_to_ptr.vmem [resolvable:$true] %s28
      %31 = dma.hbm_to_vmem [thread:$0]  %s1, 64, %s29, [#allocation6]
    $region9: #{tpu_custom_call.1} parent=1 // pred_fallthru
      _
    // Predicated region
    $region10: #{tpu_custom_call.1} parent=1 // pred_check
      _
    $region11: #{tpu_custom_call.1} parent=1 // pred_check_branch
      %33 = sbr.rel (0) target = $region13
    $region12: #{tpu_custom_call.1} parent=1 // pred_region
      %34 = dma.done [#allocation3], 896
    $region13: #{tpu_custom_call.1} parent=1 // pred_fallthru
      _
    // Predicated region
    $region14: #{tpu_custom_call.1} parent=1 // pred_check
      _
    $region15: #{tpu_custom_call.1} parent=1 // pred_check_branch
      %36 = sbr.rel (0) target = $region17
    $region16: #{tpu_custom_call.1} parent=1 // pred_region
      %37 = dma.done [#allocation6], 64
    $region17: #{tpu_custom_call.1} parent=1 // pred_fallthru
      _
    %v38 = vld [vmem:[#allocation2] sm:$0xff]
    %v39 = vld [vmem:[#allocation2 + $0x8] sm:$0xff]
    %v40 = vld [vmem:[#allocation2 + $0x10] sm:$0xff]
    %v41 = vld [vmem:[#allocation2 + $0x18] sm:$0xff]
    %v42 = vld [vmem:[#allocation2 + $0x20] sm:$0xff]
    %v43 = vld [vmem:[#allocation2 + $0x28] sm:$0xff]
    %v44 = vld [vmem:[#allocation2 + $0x30] sm:$0xff]
    %v45 = vld [vmem:[#allocation5] sm:$0xf]
    %v46 = vpack.c.bf16 %v39, %v38
    %v47 = vpack.c.bf16 %v41, %v40
    %v48 = vpack.c.bf16 %v43, %v42
    %v49 = vpack.c.bf16 %v44, %v44
    %v50 = vunpack.c.l.bf16 %v46
    %v51 = vunpack.c.h.bf16 %v46
    %v52 = vunpack.c.l.bf16 %v47
    %v53 = vunpack.c.h.bf16 %v47
    %v54 = vunpack.c.l.bf16 %v48
    %v55 = vunpack.c.h.bf16 %v48
    %v56 = vunpack.c.l.bf16 %v49
    %v57 = vsub.f32 %v38, %v50
    %v58 = vsub.f32 %v39, %v51
    %v59 = vsub.f32 %v40, %v52
    %v60 = vsub.f32 %v41, %v53
    %v61 = vsub.f32 %v42, %v54
    %v62 = vsub.f32 %v43, %v55
    %v63 = vsub.f32 %v44, %v56
    %vm64 = vcmask 31744
    %v66 = vsel %vm64, %v57, 0
    %v69 = vsel %vm64, %v58, 0
    %v72 = vsel %vm64, %v59, 0
    %v75 = vsel %vm64, %v60, 0
    %v78 = vsel %vm64, %v61, 0
    %v81 = vsel %vm64, %v62, 0
    %v84 = vsel %vm64, %v63, 0
    %vm86 = vcmask 1043456
    %v88 = vsel %vm86, %v45, 0
    %90 = vmatprep.subr.mxu0 0.0
    %91 = vmatpush1.msra.mxu0 %v88
    %92 = vmatprep.subr.mxu0 0.0
    %93 = vmatpush1.msra.mxu0 0.0
    %94 = vmatprep.subr.mxu0 0.0
    %95 = vmatpush1.msra.mxu0 0.0
    %96 = vmatprep.subr.mxu0 0.0
    %97 = vmatpush1.msra.mxu0 0.0
    %98 = vmatprep.subr.mxu0 0.0
    %99 = vmatpush1.msra.mxu0 0.0
    %100 = vmatprep.subr.mxu0 0.0
    %101 = vmatpush1.msra.mxu0 0.0
    %102 = vmatprep.subr.mxu0 0.0
    %103 = vmatpush1.msra.mxu0 0.0
    %104 = vmatprep.subr.mxu0 0.0
    %105 = vmatpush1.msra.mxu0 0.0
    %106 = vmatprep.subr.mxu0 0.0
    %107 = vmatpush1.msra.mxu0 0.0
    %108 = vmatprep.subr.mxu0 0.0
    %109 = vmatpush1.msra.mxu0 0.0
    %110 = vmatprep.subr.mxu0 0.0
    %111 = vmatpush1.msra.mxu0 0.0
    %112 = vmatprep.subr.mxu0 0.0
    %113 = vmatpush1.msra.mxu0 0.0
    %114 = vmatprep.subr.mxu0 0.0
    %115 = vmatpush1.msra.mxu0 0.0
    %116 = vmatprep.subr.mxu0 0.0
    %117 = vmatpush1.msra.mxu0 0.0
    %118 = vmatprep.subr.mxu0 0.0
    %119 = vmatpush1.msra.mxu0 0.0
    %120 = vmatprep.subr.mxu0 0.0
    %121 = vmatpush1.msra.mxu0 0.0
    %122 = vmatprep.subr.mxu0 0.0
    %123 = vmatpush1.msra.mxu0 0.0
    %124 = vmatprep.subr.mxu0 0.0
    %125 = vmatpush1.msra.mxu0 0.0
    %126 = vmatprep.subr.mxu0 0.0
    %127 = vmatpush1.msra.mxu0 0.0
    %128 = vmatprep.subr.mxu0 0.0
    %129 = vmatpush1.msra.mxu0 0.0
    %130 = vmatprep.subr.mxu0 0.0
    %131 = vmatpush1.msra.mxu0 0.0
    %132 = vmatprep.subr.mxu0 0.0
    %133 = vmatpush1.msra.mxu0 0.0
    %134 = vmatprep.subr.mxu0 0.0
    %135 = vmatpush1.msra.mxu0 0.0
    %136 = vmatprep.subr.mxu0 0.0
    %137 = vmatpush1.msra.mxu0 0.0
    %138 = vmatprep.subr.mxu0 0.0
    %139 = vmatpush1.msra.mxu0 0.0
    %140 = vmatprep.subr.mxu0 0.0
    %141 = vmatpush1.msra.mxu0 0.0
    %142 = vmatprep.subr.mxu0 0.0
    %143 = vmatpush1.msra.mxu0 0.0
    %144 = vmatprep.subr.mxu0 0.0
    %145 = vmatpush1.msra.mxu0 0.0
    %146 = vmatprep.subr.mxu0 0.0
    %147 = vmatpush1.msra.mxu0 0.0
    %148 = vmatprep.subr.mxu0 0.0
    %149 = vmatpush1.msra.mxu0 0.0
    %150 = vmatprep.subr.mxu0 0.0
    %151 = vmatpush1.msra.mxu0 0.0
    %152 = vmatprep.subr.mxu0 0.0
    %153 = vmatpush1.msra.mxu0 0.0
    %154 = vmatprep.mubr.f32.mxu0 0.0
    %155 = vmatmul.mubr.f32.gmra.mrb[0].mxu0 %v66
    %v156 = vpop.f32.mrb[0].mxu0
    %v157 = vadd.f32 0.0, %v156
    %v158 = vpop.f32.mrb[0].mxu0
    %159 = vmatprep.mubr.f32.mxu0 0.0
    %160 = vmatmul.mubr.f32.gmra.mrb[0].mxu0 %v69
    %v161 = vpop.f32.mrb[0].mxu0
    %v162 = vadd.f32 0.0, %v161
    %v163 = vpop.f32.mrb[0].mxu0
    %164 = vmatprep.mubr.f32.mxu0 0.0
    %165 = vmatmul.mubr.f32.gmra.mrb[0].mxu0 %v72
    %v166 = vpop.f32.mrb[0].mxu0
    %v167 = vadd.f32 0.0, %v166
    %v168 = vpop.f32.mrb[0].mxu0
    %169 = vmatprep.mubr.f32.mxu0 0.0
    %170 = vmatmul.mubr.f32.gmra.mrb[0].mxu0 %v75
    %v171 = vpop.f32.mrb[0].mxu0
    %v172 = vadd.f32 0.0, %v171
    %v173 = vpop.f32.mrb[0].mxu0
    %174 = vmatprep.mubr.f32.mxu0 0.0
    %175 = vmatmul.mubr.f32.gmra.mrb[0].mxu0 %v78
    %v176 = vpop.f32.mrb[0].mxu0
    %v177 = vadd.f32 0.0, %v176
    %v178 = vpop.f32.mrb[0].mxu0
    %179 = vmatprep.mubr.f32.mxu0 0.0
    %180 = vmatmul.mubr.f32.gmra.mrb[0].mxu0 %v81
    %v181 = vpop.f32.mrb[0].mxu0
    %v182 = vadd.f32 0.0, %v181
    %v183 = vpop.f32.mrb[0].mxu0
    %184 = vmatprep.mubr.f32.mxu0 0.0
    %185 = vmatmul.mubr.f32.gmra.mrb[0].mxu0 %v84
    %v186 = vpop.f32.mrb[0].mxu0
    %v187 = vadd.f32 0.0, %v186
    %v188 = vpop.f32.mrb[0].mxu0
    %189 = vdwg.mxu0
    %v191 = vsel %vm64, %v50, 0
    %v194 = vsel %vm64, %v51, 0
    %v197 = vsel %vm64, %v52, 0
    %v200 = vsel %vm64, %v53, 0
    %v203 = vsel %vm64, %v54, 0
    %v206 = vsel %vm64, %v55, 0
    %v209 = vsel %vm64, %v56, 0
    %211 = vmatprep.subr.mxu0 0.0
    %212 = vmatpush1.msra.mxu0 %v88
    %213 = vmatprep.subr.mxu0 0.0
    %214 = vmatpush1.msra.mxu0 0.0
    %215 = vmatprep.subr.mxu0 0.0
    %216 = vmatpush1.msra.mxu0 0.0
    %217 = vmatprep.subr.mxu0 0.0
    %218 = vmatpush1.msra.mxu0 0.0
    %219 = vmatprep.subr.mxu0 0.0
    %220 = vmatpush1.msra.mxu0 0.0
    %221 = vmatprep.subr.mxu0 0.0
    %222 = vmatpush1.msra.mxu0 0.0
    %223 = vmatprep.subr.mxu0 0.0
    %224 = vmatpush1.msra.mxu0 0.0
    %225 = vmatprep.subr.mxu0 0.0
    %226 = vmatpush1.msra.mxu0 0.0
    %227 = vmatprep.subr.mxu0 0.0
    %228 = vmatpush1.msra.mxu0 0.0
    %229 = vmatprep.subr.mxu0 0.0
    %230 = vmatpush1.msra.mxu0 0.0
    %231 = vmatprep.subr.mxu0 0.0
    %232 = vmatpush1.msra.mxu0 0.0
    %233 = vmatprep.subr.mxu0 0.0
    %234 = vmatpush1.msra.mxu0 0.0
    %235 = vmatprep.subr.mxu0 0.0
    %236 = vmatpush1.msra.mxu0 0.0
    %237 = vmatprep.subr.mxu0 0.0
    %238 = vmatpush1.msra.mxu0 0.0
    %239 = vmatprep.subr.mxu0 0.0
    %240 = vmatpush1.msra.mxu0 0.0
    %241 = vmatprep.subr.mxu0 0.0
    %242 = vmatpush1.msra.mxu0 0.0
    %243 = vmatprep.subr.mxu0 0.0
    %244 = vmatpush1.msra.mxu0 0.0
    %245 = vmatprep.subr.mxu0 0.0
    %246 = vmatpush1.msra.mxu0 0.0
    %247 = vmatprep.subr.mxu0 0.0
    %248 = vmatpush1.msra.mxu0 0.0
    %249 = vmatprep.subr.mxu0 0.0
    %250 = vmatpush1.msra.mxu0 0.0
    %251 = vmatprep.subr.mxu0 0.0
    %252 = vmatpush1.msra.mxu0 0.0
    %253 = vmatprep.subr.mxu0 0.0
    %254 = vmatpush1.msra.mxu0 0.0
    %255 = vmatprep.subr.mxu0 0.0
    %256 = vmatpush1.msra.mxu0 0.0
    %257 = vmatprep.subr.mxu0 0.0
    %258 = vmatpush1.msra.mxu0 0.0
    %259 = vmatprep.subr.mxu0 0.0
    %260 = vmatpush1.msra.mxu0 0.0
    %261 = vmatprep.subr.mxu0 0.0
    %262 = vmatpush1.msra.mxu0 0.0
    %263 = vmatprep.subr.mxu0 0.0
    %264 = vmatpush1.msra.mxu0 0.0
    %265 = vmatprep.subr.mxu0 0.0
    %266 = vmatpush1.msra.mxu0 0.0
    %267 = vmatprep.subr.mxu0 0.0
    %268 = vmatpush1.msra.mxu0 0.0
    %269 = vmatprep.subr.mxu0 0.0
    %270 = vmatpush1.msra.mxu0 0.0
    %271 = vmatprep.subr.mxu0 0.0
    %272 = vmatpush1.msra.mxu0 0.0
    %273 = vmatprep.subr.mxu0 0.0
    %274 = vmatpush1.msra.mxu0 0.0
    %275 = vmatprep.mubr.f32.mxu0 0.0
    %276 = vmatmul.mubr.f32.gmra.mrb[0].mxu0 %v191
    %v277 = vpop.f32.mrb[0].mxu0
    %v278 = vadd.f32 %v157, %v277
    %v279 = vpop.f32.mrb[0].mxu0
    %280 = vmatprep.mubr.f32.mxu0 0.0
    %281 = vmatmul.mubr.f32.gmra.mrb[0].mxu0 %v194
    %v282 = vpop.f32.mrb[0].mxu0
    %v283 = vadd.f32 %v162, %v282
    %v284 = vpop.f32.mrb[0].mxu0
    %285 = vmatprep.mubr.f32.mxu0 0.0
    %286 = vmatmul.mubr.f32.gmra.mrb[0].mxu0 %v197
    %v287 = vpop.f32.mrb[0].mxu0
    %v288 = vadd.f32 %v167, %v287
    %v289 = vpop.f32.mrb[0].mxu0
    %290 = vmatprep.mubr.f32.mxu0 0.0
    %291 = vmatmul.mubr.f32.gmra.mrb[0].mxu0 %v200
    %v292 = vpop.f32.mrb[0].mxu0
    %v293 = vadd.f32 %v172, %v292
    %v294 = vpop.f32.mrb[0].mxu0
    %295 = vmatprep.mubr.f32.mxu0 0.0
    %296 = vmatmul.mubr.f32.gmra.mrb[0].mxu0 %v203
    %v297 = vpop.f32.mrb[0].mxu0
    %v298 = vadd.f32 %v177, %v297
    %v299 = vpop.f32.mrb[0].mxu0
    %300 = vmatprep.mubr.f32.mxu0 0.0
    %301 = vmatmul.mubr.f32.gmra.mrb[0].mxu0 %v206
    %v302 = vpop.f32.mrb[0].mxu0
    %v303 = vadd.f32 %v182, %v302
    %v304 = vpop.f32.mrb[0].mxu0
    %305 = vmatprep.mubr.f32.mxu0 0.0
    %306 = vmatmul.mubr.f32.gmra.mrb[0].mxu0 %v209
    %v307 = vpop.f32.mrb[0].mxu0
    %v308 = vadd.f32 %v187, %v307
    %v309 = vpop.f32.mrb[0].mxu0
    %310 = vdwg.mxu0
    %v311 = vlaneseq
    %v312 = vand.u32 %v311, 127
    %v313 = vand.u32 %v312, 31
    %v314 = vcvt.s32.f32 %v313
    %v315 = vmul.f32 %v314, 0.516129
    %v316 = vadd.f32 %v315, 0.10853848
    %v317 = vmul.f32 %v278, 0.62831855
    %v318 = vmul.f32 %v283, 0.62831855
    %v319 = vmul.f32 %v288, 0.62831855
    %v320 = vmul.f32 %v293, 0.62831855
    %v321 = vmul.f32 %v298, 0.62831855
    %v322 = vmul.f32 %v303, 0.62831855
    %v323 = vmul.f32 %v308, 0.62831855
    %v324 = vand.u32 2147483647, %v317
    %vm325 = vcmp.le.f32.partialorder %v324, 0.7853982
    %vm326 = vcmp.lt.s32.totalorder %v317, 0
    %v327 = vand.u32 %v317, 2139095040
    %v328 = vshrl.u32 %v327, 23
    %v329 = vsub.s32 %v328, 127
    %v330 = vand.u32 2147483647, %v317
    %v331 = vand.u32 %v330, 8388607
    %v332 = vor.u32 %v331, 8388608
    %v333 = vsub.s32 0, %v332
    %v334 = vadd.s32 %v329, 1
    %vm335 = vcmp.gt.s32.totalorder %v334, 0
    %v336 = vsel %vm335, %v334, 0
    %v337 = vshrl.u32 %v336, 5
    %v338 = vand.u32 %v336, 31
    %v339 = vsub.s32 32, %v338
    %v340 = vshrl.u32 683565275, %v339
    %v341 = vshll.u32 683565275, %v338
    %v342 = vshrl.u32 2475754826, %v339
    %v343 = vor.u32 %v341, %v342
    %v344 = vshll.u32 2475754826, %v338
    %v345 = vshrl.u32 2131351028, %v339
    %v346 = vor.u32 %v344, %v345
    %v347 = vshll.u32 2131351028, %v338
    %v348 = vshrl.u32 2102212464, %v339
    %v349 = vor.u32 %v347, %v348
    %v350 = vshll.u32 2102212464, %v338
    %v351 = vshrl.u32 920167782, %v339
    %v352 = vor.u32 %v350, %v351
    %v353 = vshll.u32 920167782, %v338
    %v354 = vshrl.u32 1326507024, %v339
    %v355 = vor.u32 %v353, %v354
    %vm356 = vcmp.lt.s32.totalorder %v337, 1
    %vm357 = vcmp.lt.s32.totalorder %v337, 2
    %vm358 = vcmp.lt.s32.totalorder %v337, 3
    %vm359 = vcmp.lt.s32.totalorder %v337, 4
    %v360 = vsel %vm356, %v340, %v343
    %v361 = vsel %vm359, %v349, 2102212464
    %v362 = vsel %vm358, %v346, %v361
    %v363 = vsel %vm357, %v360, %v362
    %v364 = vsel %vm356, %v343, %v346
    %v365 = vsel %vm359, %v352, 920167782
    %v366 = vsel %vm358, %v349, %v365
    %v367 = vsel %vm357, %v364, %v366
    %v368 = vsel %vm356, %v346, %v349
    %v369 = vsel %vm359, %v355, 1326507024
    %v370 = vsel %vm358, %v352, %v369
    %v371 = vsel %vm357, %v368, %v370
    %v372 = vshll.u32 %v332, 8
    %v373 = vmul.u32.u64.compose %v372, %v371
    %v374 = vextract.low.u32 %v373
    %v375 = vextract.high.u32 %v373
    %v376 = vmul.u32.u64.compose %v372, %v367
    %v377 = vextract.low.u32 %v376
    %v378 = vextract.high.u32 %v376
    %v379 = vmul.u32 %v372, %v363
    %v380 = vadd.s32 %v375, %v377
    %vm381 = vc.u32 %v375, %v377
    %v382 = vadd.s32 %v378, 1
    %v383 = vsel %vm381, %v382, %v378
    %v384 = vadd.s32 %v379, %v383
    %v385 = vadd.s32 %v384, 536870912
    %v386 = vshrl.u32 %v385, 30
    %v387 = vshll.u32 %v386, 30
    %v388 = vsub.s32 %v384, %v387
    %vm389 = vcmp.lt.s32.totalorder %v388, 0
    %v390 = vsub.s32 0, %v388
    %v391 = vsel %vm389, %v390, %v388
    %v392 = vclz %v391
    %v393 = vsub.s32 %v392, 2
    %vm394 = vcmp.gt.s32.totalorder 0, %v393
    %v395 = vsel %vm394, 0, %v393
    %v396 = vsub.s32 32, %v395
    %v397 = vshll.u32 %v388, %v395
    %v398 = vshrl.u32 %v380, %v396
    %v399 = vor.u32 %v397, %v398
    %v400 = vsub.s32 4294967266, %v395
    %v401 = vadd.s32 %v400, 127
    %v402 = vshll.u32 %v401, 23
    %v403 = vor.u32 4788187, %v402
    %v404 = vand.u32 2147483647, %v403
    %v406 = vcvt.s32.f32 %v399
    %v407 = vmul.f32 %v406, %v404
    %v408 = vxor.u32 %v407, 2147483648
    %v409 = vsel %vm326, %v408, %v407
    %v410 = vsub.s32 4, %v386
    %v411 = vsel %vm326, %v410, %v386
    %v412 = vsel %vm325, %v317, %v409
    %v413 = vsel %vm325, 0, %v411
    %v414 = vcosq.f32.pop %v412
    %v415 = vsinq.f32.pop %v412
    %vm416 = vweird.f32 %v317
    %v417 = vand.u32 %v413, 3
    %vm418 = vcmp.lt.s32.totalorder %v417, 2
    %vm419 = vcmp.eq.s32.totalorder %v417, 0
    %v420 = vxor.u32 %v415, 2147483648
    %v421 = vsel %vm419, %v414, %v420
    %vm422 = vcmp.eq.s32.totalorder %v417, 2
    %v423 = vxor.u32 %v414, 2147483648
    %v424 = vsel %vm422, %v423, %v415
    %v425 = vsel %vm418, %v421, %v424
    %v426 = vsel %vm416, nan, %v425
    %v427 = vand.u32 2147483647, %v318
    %vm428 = vcmp.le.f32.partialorder %v427, 0.7853982
    %vm429 = vcmp.lt.s32.totalorder %v318, 0
    %v430 = vand.u32 %v318, 2139095040
    %v431 = vshrl.u32 %v430, 23
    %v432 = vsub.s32 %v431, 127
    %v433 = vand.u32 2147483647, %v318
    %v434 = vand.u32 %v433, 8388607
    %v435 = vor.u32 %v434, 8388608
    %v436 = vsub.s32 0, %v435
    %v437 = vadd.s32 %v432, 1
    %vm438 = vcmp.gt.s32.totalorder %v437, 0
    %v439 = vsel %vm438, %v437, 0
    %v440 = vshrl.u32 %v439, 5
    %v441 = vand.u32 %v439, 31
    %v442 = vsub.s32 32, %v441
    %v443 = vshrl.u32 683565275, %v442
    %v444 = vshll.u32 683565275, %v441
    %v445 = vshrl.u32 2475754826, %v442
    %v446 = vor.u32 %v444, %v445
    %v447 = vshll.u32 2475754826, %v441
    %v448 = vshrl.u32 2131351028, %v442
    %v449 = vor.u32 %v447, %v448
    %v450 = vshll.u32 2131351028, %v441
    %v451 = vshrl.u32 2102212464, %v442
    %v452 = vor.u32 %v450, %v451
    %v453 = vshll.u32 2102212464, %v441
    %v454 = vshrl.u32 920167782, %v442
    %v455 = vor.u32 %v453, %v454
    %v456 = vshll.u32 920167782, %v441
    %v457 = vshrl.u32 1326507024, %v442
    %v458 = vor.u32 %v456, %v457
    %vm459 = vcmp.lt.s32.totalorder %v440, 1
    %vm460 = vcmp.lt.s32.totalorder %v440, 2
    %vm461 = vcmp.lt.s32.totalorder %v440, 3
    %vm462 = vcmp.lt.s32.totalorder %v440, 4
    %v463 = vsel %vm459, %v443, %v446
    %v464 = vsel %vm462, %v452, 2102212464
    %v465 = vsel %vm461, %v449, %v464
    %v466 = vsel %vm460, %v463, %v465
    %v467 = vsel %vm459, %v446, %v449
    %v468 = vsel %vm462, %v455, 920167782
    %v469 = vsel %vm461, %v452, %v468
    %v470 = vsel %vm460, %v467, %v469
    %v471 = vsel %vm459, %v449, %v452
    %v472 = vsel %vm462, %v458, 1326507024
    %v473 = vsel %vm461, %v455, %v472
    %v474 = vsel %vm460, %v471, %v473
    %v475 = vshll.u32 %v435, 8
    %v476 = vmul.u32.u64.compose %v475, %v474
    %v477 = vextract.low.u32 %v476
    %v478 = vextract.high.u32 %v476
    %v479 = vmul.u32.u64.compose %v475, %v470
    %v480 = vextract.low.u32 %v479
    %v481 = vextract.high.u32 %v479
    %v482 = vmul.u32 %v475, %v466
    %v483 = vadd.s32 %v478, %v480
    %vm484 = vc.u32 %v478, %v480
    %v485 = vadd.s32 %v481, 1
    %v486 = vsel %vm484, %v485, %v481
    %v487 = vadd.s32 %v482, %v486
    %v488 = vadd.s32 %v487, 536870912
    %v489 = vshrl.u32 %v488, 30
    %v490 = vshll.u32 %v489, 30
    %v491 = vsub.s32 %v487, %v490
    %vm492 = vcmp.lt.s32.totalorder %v491, 0
    %v493 = vsub.s32 0, %v491
    %v494 = vsel %vm492, %v493, %v491
    %v495 = vclz %v494
    %v496 = vsub.s32 %v495, 2
    %vm497 = vcmp.gt.s32.totalorder 0, %v496
    %v498 = vsel %vm497, 0, %v496
    %v499 = vsub.s32 32, %v498
    %v500 = vshll.u32 %v491, %v498
    %v501 = vshrl.u32 %v483, %v499
    %v502 = vor.u32 %v500, %v501
    %v503 = vsub.s32 4294967266, %v498
    %v504 = vadd.s32 %v503, 127
    %v505 = vshll.u32 %v504, 23
    %v506 = vor.u32 4788187, %v505
    %v507 = vand.u32 2147483647, %v506
    %v509 = vcvt.s32.f32 %v502
    %v510 = vmul.f32 %v509, %v507
    %v511 = vxor.u32 %v510, 2147483648
    %v512 = vsel %vm429, %v511, %v510
    %v513 = vsub.s32 4, %v489
    %v514 = vsel %vm429, %v513, %v489
    %v515 = vsel %vm428, %v318, %v512
    %v516 = vsel %vm428, 0, %v514
    %v517 = vcosq.f32.pop %v515
    %v518 = vsinq.f32.pop %v515
    %vm519 = vweird.f32 %v318
    %v520 = vand.u32 %v516, 3
    %vm521 = vcmp.lt.s32.totalorder %v520, 2
    %vm522 = vcmp.eq.s32.totalorder %v520, 0
    %v523 = vxor.u32 %v518, 2147483648
    %v524 = vsel %vm522, %v517, %v523
    %vm525 = vcmp.eq.s32.totalorder %v520, 2
    %v526 = vxor.u32 %v517, 2147483648
    %v527 = vsel %vm525, %v526, %v518
    %v528 = vsel %vm521, %v524, %v527
    %v529 = vsel %vm519, nan, %v528
    %v530 = vand.u32 2147483647, %v319
    %vm531 = vcmp.le.f32.partialorder %v530, 0.7853982
    %vm532 = vcmp.lt.s32.totalorder %v319, 0
    %v533 = vand.u32 %v319, 2139095040
    %v534 = vshrl.u32 %v533, 23
    %v535 = vsub.s32 %v534, 127
    %v536 = vand.u32 2147483647, %v319
    %v537 = vand.u32 %v536, 8388607
    %v538 = vor.u32 %v537, 8388608
    %v539 = vsub.s32 0, %v538
    %v540 = vadd.s32 %v535, 1
    %vm541 = vcmp.gt.s32.totalorder %v540, 0
    %v542 = vsel %vm541, %v540, 0
    %v543 = vshrl.u32 %v542, 5
    %v544 = vand.u32 %v542, 31
    %v545 = vsub.s32 32, %v544
    %v546 = vshrl.u32 683565275, %v545
    %v547 = vshll.u32 683565275, %v544
    %v548 = vshrl.u32 2475754826, %v545
    %v549 = vor.u32 %v547, %v548
    %v550 = vshll.u32 2475754826, %v544
    %v551 = vshrl.u32 2131351028, %v545
    %v552 = vor.u32 %v550, %v551
    %v553 = vshll.u32 2131351028, %v544
    %v554 = vshrl.u32 2102212464, %v545
    %v555 = vor.u32 %v553, %v554
    %v556 = vshll.u32 2102212464, %v544
    %v557 = vshrl.u32 920167782, %v545
    %v558 = vor.u32 %v556, %v557
    %v559 = vshll.u32 920167782, %v544
    %v560 = vshrl.u32 1326507024, %v545
    %v561 = vor.u32 %v559, %v560
    %vm562 = vcmp.lt.s32.totalorder %v543, 1
    %vm563 = vcmp.lt.s32.totalorder %v543, 2
    %vm564 = vcmp.lt.s32.totalorder %v543, 3
    %vm565 = vcmp.lt.s32.totalorder %v543, 4
    %v566 = vsel %vm562, %v546, %v549
    %v567 = vsel %vm565, %v555, 2102212464
    %v568 = vsel %vm564, %v552, %v567
    %v569 = vsel %vm563, %v566, %v568
    %v570 = vsel %vm562, %v549, %v552
    %v571 = vsel %vm565, %v558, 920167782
    %v572 = vsel %vm564, %v555, %v571
    %v573 = vsel %vm563, %v570, %v572
    %v574 = vsel %vm562, %v552, %v555
    %v575 = vsel %vm565, %v561, 1326507024
    %v576 = vsel %vm564, %v558, %v575
    %v577 = vsel %vm563, %v574, %v576
    %v578 = vshll.u32 %v538, 8
    %v579 = vmul.u32.u64.compose %v578, %v577
    %v580 = vextract.low.u32 %v579
    %v581 = vextract.high.u32 %v579
    %v582 = vmul.u32.u64.compose %v578, %v573
    %v583 = vextract.low.u32 %v582
    %v584 = vextract.high.u32 %v582
    %v585 = vmul.u32 %v578, %v569
    %v586 = vadd.s32 %v581, %v583
    %vm587 = vc.u32 %v581, %v583
    %v588 = vadd.s32 %v584, 1
    %v589 = vsel %vm587, %v588, %v584
    %v590 = vadd.s32 %v585, %v589
    %v591 = vadd.s32 %v590, 536870912
    %v592 = vshrl.u32 %v591, 30
    %v593 = vshll.u32 %v592, 30
    %v594 = vsub.s32 %v590, %v593
    %vm595 = vcmp.lt.s32.totalorder %v594, 0
    %v596 = vsub.s32 0, %v594
    %v597 = vsel %vm595, %v596, %v594
    %v598 = vclz %v597
    %v599 = vsub.s32 %v598, 2
    %vm600 = vcmp.gt.s32.totalorder 0, %v599
    %v601 = vsel %vm600, 0, %v599
    %v602 = vsub.s32 32, %v601
    %v603 = vshll.u32 %v594, %v601
    %v604 = vshrl.u32 %v586, %v602
    %v605 = vor.u32 %v603, %v604
    %v606 = vsub.s32 4294967266, %v601
    %v607 = vadd.s32 %v606, 127
    %v608 = vshll.u32 %v607, 23
    %v609 = vor.u32 4788187, %v608
    %v610 = vand.u32 2147483647, %v609
    %v612 = vcvt.s32.f32 %v605
    %v613 = vmul.f32 %v612, %v610
    %v614 = vxor.u32 %v613, 2147483648
    %v615 = vsel %vm532, %v614, %v613
    %v616 = vsub.s32 4, %v592
    %v617 = vsel %vm532, %v616, %v592
    %v618 = vsel %vm531, %v319, %v615
    %v619 = vsel %vm531, 0, %v617
    %v620 = vcosq.f32.pop %v618
    %v621 = vsinq.f32.pop %v618
    %vm622 = vweird.f32 %v319
    %v623 = vand.u32 %v619, 3
    %vm624 = vcmp.lt.s32.totalorder %v623, 2
    %vm625 = vcmp.eq.s32.totalorder %v623, 0
    %v626 = vxor.u32 %v621, 2147483648
    %v627 = vsel %vm625, %v620, %v626
    %vm628 = vcmp.eq.s32.totalorder %v623, 2
    %v629 = vxor.u32 %v620, 2147483648
    %v630 = vsel %vm628, %v629, %v621
    %v631 = vsel %vm624, %v627, %v630
    %v632 = vsel %vm622, nan, %v631
    %v633 = vand.u32 2147483647, %v320
    %vm634 = vcmp.le.f32.partialorder %v633, 0.7853982
    %vm635 = vcmp.lt.s32.totalorder %v320, 0
    %v636 = vand.u32 %v320, 2139095040
    %v637 = vshrl.u32 %v636, 23
    %v638 = vsub.s32 %v637, 127
    %v639 = vand.u32 2147483647, %v320
    %v640 = vand.u32 %v639, 8388607
    %v641 = vor.u32 %v640, 8388608
    %v642 = vsub.s32 0, %v641
    %v643 = vadd.s32 %v638, 1
    %vm644 = vcmp.gt.s32.totalorder %v643, 0
    %v645 = vsel %vm644, %v643, 0
    %v646 = vshrl.u32 %v645, 5
    %v647 = vand.u32 %v645, 31
    %v648 = vsub.s32 32, %v647
    %v649 = vshrl.u32 683565275, %v648
    %v650 = vshll.u32 683565275, %v647
    %v651 = vshrl.u32 2475754826, %v648
    %v652 = vor.u32 %v650, %v651
    %v653 = vshll.u32 2475754826, %v647
    %v654 = vshrl.u32 2131351028, %v648
    %v655 = vor.u32 %v653, %v654
    %v656 = vshll.u32 2131351028, %v647
    %v657 = vshrl.u32 2102212464, %v648
    %v658 = vor.u32 %v656, %v657
    %v659 = vshll.u32 2102212464, %v647
    %v660 = vshrl.u32 920167782, %v648
    %v661 = vor.u32 %v659, %v660
    %v662 = vshll.u32 920167782, %v647
    %v663 = vshrl.u32 1326507024, %v648
    %v664 = vor.u32 %v662, %v663
    %vm665 = vcmp.lt.s32.totalorder %v646, 1
    %vm666 = vcmp.lt.s32.totalorder %v646, 2
    %vm667 = vcmp.lt.s32.totalorder %v646, 3
    %vm668 = vcmp.lt.s32.totalorder %v646, 4
    %v669 = vsel %vm665, %v649, %v652
    %v670 = vsel %vm668, %v658, 2102212464
    %v671 = vsel %vm667, %v655, %v670
    %v672 = vsel %vm666, %v669, %v671
    %v673 = vsel %vm665, %v652, %v655
    %v674 = vsel %vm668, %v661, 920167782
    %v675 = vsel %vm667, %v658, %v674
    %v676 = vsel %vm666, %v673, %v675
    %v677 = vsel %vm665, %v655, %v658
    %v678 = vsel %vm668, %v664, 1326507024
    %v679 = vsel %vm667, %v661, %v678
    %v680 = vsel %vm666, %v677, %v679
    %v681 = vshll.u32 %v641, 8
    %v682 = vmul.u32.u64.compose %v681, %v680
    %v683 = vextract.low.u32 %v682
    %v684 = vextract.high.u32 %v682
    %v685 = vmul.u32.u64.compose %v681, %v676
    %v686 = vextract.low.u32 %v685
    %v687 = vextract.high.u32 %v685
    %v688 = vmul.u32 %v681, %v672
    %v689 = vadd.s32 %v684, %v686
    %vm690 = vc.u32 %v684, %v686
    %v691 = vadd.s32 %v687, 1
    %v692 = vsel %vm690, %v691, %v687
    %v693 = vadd.s32 %v688, %v692
    %v694 = vadd.s32 %v693, 536870912
    %v695 = vshrl.u32 %v694, 30
    %v696 = vshll.u32 %v695, 30
    %v697 = vsub.s32 %v693, %v696
    %vm698 = vcmp.lt.s32.totalorder %v697, 0
    %v699 = vsub.s32 0, %v697
    %v700 = vsel %vm698, %v699, %v697
    %v701 = vclz %v700
    %v702 = vsub.s32 %v701, 2
    %vm703 = vcmp.gt.s32.totalorder 0, %v702
    %v704 = vsel %vm703, 0, %v702
    %v705 = vsub.s32 32, %v704
    %v706 = vshll.u32 %v697, %v704
    %v707 = vshrl.u32 %v689, %v705
    %v708 = vor.u32 %v706, %v707
    %v709 = vsub.s32 4294967266, %v704
    %v710 = vadd.s32 %v709, 127
    %v711 = vshll.u32 %v710, 23
    %v712 = vor.u32 4788187, %v711
    %v713 = vand.u32 2147483647, %v712
    %v715 = vcvt.s32.f32 %v708
    %v716 = vmul.f32 %v715, %v713
    %v717 = vxor.u32 %v716, 2147483648
    %v718 = vsel %vm635, %v717, %v716
    %v719 = vsub.s32 4, %v695
    %v720 = vsel %vm635, %v719, %v695
    %v721 = vsel %vm634, %v320, %v718
    %v722 = vsel %vm634, 0, %v720
    %v723 = vcosq.f32.pop %v721
    %v724 = vsinq.f32.pop %v721
    %vm725 = vweird.f32 %v320
    %v726 = vand.u32 %v722, 3
    %vm727 = vcmp.lt.s32.totalorder %v726, 2
    %vm728 = vcmp.eq.s32.totalorder %v726, 0
    %v729 = vxor.u32 %v724, 2147483648
    %v730 = vsel %vm728, %v723, %v729
    %vm731 = vcmp.eq.s32.totalorder %v726, 2
    %v732 = vxor.u32 %v723, 2147483648
    %v733 = vsel %vm731, %v732, %v724
    %v734 = vsel %vm727, %v730, %v733
    %v735 = vsel %vm725, nan, %v734
    %v736 = vand.u32 2147483647, %v321
    %vm737 = vcmp.le.f32.partialorder %v736, 0.7853982
    %vm738 = vcmp.lt.s32.totalorder %v321, 0
    %v739 = vand.u32 %v321, 2139095040
    %v740 = vshrl.u32 %v739, 23
    %v741 = vsub.s32 %v740, 127
    %v742 = vand.u32 2147483647, %v321
    %v743 = vand.u32 %v742, 8388607
    %v744 = vor.u32 %v743, 8388608
    %v745 = vsub.s32 0, %v744
    %v746 = vadd.s32 %v741, 1
    %vm747 = vcmp.gt.s32.totalorder %v746, 0
    %v748 = vsel %vm747, %v746, 0
    %v749 = vshrl.u32 %v748, 5
    %v750 = vand.u32 %v748, 31
    %v751 = vsub.s32 32, %v750
    %v752 = vshrl.u32 683565275, %v751
    %v753 = vshll.u32 683565275, %v750
    %v754 = vshrl.u32 2475754826, %v751
    %v755 = vor.u32 %v753, %v754
    %v756 = vshll.u32 2475754826, %v750
    %v757 = vshrl.u32 2131351028, %v751
    %v758 = vor.u32 %v756, %v757
    %v759 = vshll.u32 2131351028, %v750
    %v760 = vshrl.u32 2102212464, %v751
    %v761 = vor.u32 %v759, %v760
    %v762 = vshll.u32 2102212464, %v750
    %v763 = vshrl.u32 920167782, %v751
    %v764 = vor.u32 %v762, %v763
    %v765 = vshll.u32 920167782, %v750
    %v766 = vshrl.u32 1326507024, %v751
    %v767 = vor.u32 %v765, %v766
    %vm768 = vcmp.lt.s32.totalorder %v749, 1
    %vm769 = vcmp.lt.s32.totalorder %v749, 2
    %vm770 = vcmp.lt.s32.totalorder %v749, 3
    %vm771 = vcmp.lt.s32.totalorder %v749, 4
    %v772 = vsel %vm768, %v752, %v755
    %v773 = vsel %vm771, %v761, 2102212464
    %v774 = vsel %vm770, %v758, %v773
    %v775 = vsel %vm769, %v772, %v774
    %v776 = vsel %vm768, %v755, %v758
    %v777 = vsel %vm771, %v764, 920167782
    %v778 = vsel %vm770, %v761, %v777
    %v779 = vsel %vm769, %v776, %v778
    %v780 = vsel %vm768, %v758, %v761
    %v781 = vsel %vm771, %v767, 1326507024
    %v782 = vsel %vm770, %v764, %v781
    %v783 = vsel %vm769, %v780, %v782
    %v784 = vshll.u32 %v744, 8
    %v785 = vmul.u32.u64.compose %v784, %v783
    %v786 = vextract.low.u32 %v785
    %v787 = vextract.high.u32 %v785
    %v788 = vmul.u32.u64.compose %v784, %v779
    %v789 = vextract.low.u32 %v788
    %v790 = vextract.high.u32 %v788
    %v791 = vmul.u32 %v784, %v775
    %v792 = vadd.s32 %v787, %v789
    %vm793 = vc.u32 %v787, %v789
    %v794 = vadd.s32 %v790, 1
    %v795 = vsel %vm793, %v794, %v790
    %v796 = vadd.s32 %v791, %v795
    %v797 = vadd.s32 %v796, 536870912
    %v798 = vshrl.u32 %v797, 30
    %v799 = vshll.u32 %v798, 30
    %v800 = vsub.s32 %v796, %v799
    %vm801 = vcmp.lt.s32.totalorder %v800, 0
    %v802 = vsub.s32 0, %v800
    %v803 = vsel %vm801, %v802, %v800
    %v804 = vclz %v803
    %v805 = vsub.s32 %v804, 2
    %vm806 = vcmp.gt.s32.totalorder 0, %v805
    %v807 = vsel %vm806, 0, %v805
    %v808 = vsub.s32 32, %v807
    %v809 = vshll.u32 %v800, %v807
    %v810 = vshrl.u32 %v792, %v808
    %v811 = vor.u32 %v809, %v810
    %v812 = vsub.s32 4294967266, %v807
    %v813 = vadd.s32 %v812, 127
    %v814 = vshll.u32 %v813, 23
    %v815 = vor.u32 4788187, %v814
    %v816 = vand.u32 2147483647, %v815
    %v818 = vcvt.s32.f32 %v811
    %v819 = vmul.f32 %v818, %v816
    %v820 = vxor.u32 %v819, 2147483648
    %v821 = vsel %vm738, %v820, %v819
    %v822 = vsub.s32 4, %v798
    %v823 = vsel %vm738, %v822, %v798
    %v824 = vsel %vm737, %v321, %v821
    %v825 = vsel %vm737, 0, %v823
    %v826 = vcosq.f32.pop %v824
    %v827 = vsinq.f32.pop %v824
    %vm828 = vweird.f32 %v321
    %v829 = vand.u32 %v825, 3
    %vm830 = vcmp.lt.s32.totalorder %v829, 2
    %vm831 = vcmp.eq.s32.totalorder %v829, 0
    %v832 = vxor.u32 %v827, 2147483648
    %v833 = vsel %vm831, %v826, %v832
    %vm834 = vcmp.eq.s32.totalorder %v829, 2
    %v835 = vxor.u32 %v826, 2147483648
    %v836 = vsel %vm834, %v835, %v827
    %v837 = vsel %vm830, %v833, %v836
    %v838 = vsel %vm828, nan, %v837
    %v839 = vand.u32 2147483647, %v322
    %vm840 = vcmp.le.f32.partialorder %v839, 0.7853982
    %vm841 = vcmp.lt.s32.totalorder %v322, 0
    %v842 = vand.u32 %v322, 2139095040
    %v843 = vshrl.u32 %v842, 23
    %v844 = vsub.s32 %v843, 127
    %v845 = vand.u32 2147483647, %v322
    %v846 = vand.u32 %v845, 8388607
    %v847 = vor.u32 %v846, 8388608
    %v848 = vsub.s32 0, %v847
    %v849 = vadd.s32 %v844, 1
    %vm850 = vcmp.gt.s32.totalorder %v849, 0
    %v851 = vsel %vm850, %v849, 0
    %v852 = vshrl.u32 %v851, 5
    %v853 = vand.u32 %v851, 31
    %v854 = vsub.s32 32, %v853
    %v855 = vshrl.u32 683565275, %v854
    %v856 = vshll.u32 683565275, %v853
    %v857 = vshrl.u32 2475754826, %v854
    %v858 = vor.u32 %v856, %v857
    %v859 = vshll.u32 2475754826, %v853
    %v860 = vshrl.u32 2131351028, %v854
    %v861 = vor.u32 %v859, %v860
    %v862 = vshll.u32 2131351028, %v853
    %v863 = vshrl.u32 2102212464, %v854
    %v864 = vor.u32 %v862, %v863
    %v865 = vshll.u32 2102212464, %v853
    %v866 = vshrl.u32 920167782, %v854
    %v867 = vor.u32 %v865, %v866
    %v868 = vshll.u32 920167782, %v853
    %v869 = vshrl.u32 1326507024, %v854
    %v870 = vor.u32 %v868, %v869
    %vm871 = vcmp.lt.s32.totalorder %v852, 1
    %vm872 = vcmp.lt.s32.totalorder %v852, 2
    %vm873 = vcmp.lt.s32.totalorder %v852, 3
    %vm874 = vcmp.lt.s32.totalorder %v852, 4
    %v875 = vsel %vm871, %v855, %v858
    %v876 = vsel %vm874, %v864, 2102212464
    %v877 = vsel %vm873, %v861, %v876
    %v878 = vsel %vm872, %v875, %v877
    %v879 = vsel %vm871, %v858, %v861
    %v880 = vsel %vm874, %v867, 920167782
    %v881 = vsel %vm873, %v864, %v880
    %v882 = vsel %vm872, %v879, %v881
    %v883 = vsel %vm871, %v861, %v864
    %v884 = vsel %vm874, %v870, 1326507024
    %v885 = vsel %vm873, %v867, %v884
    %v886 = vsel %vm872, %v883, %v885
    %v887 = vshll.u32 %v847, 8
    %v888 = vmul.u32.u64.compose %v887, %v886
    %v889 = vextract.low.u32 %v888
    %v890 = vextract.high.u32 %v888
    %v891 = vmul.u32.u64.compose %v887, %v882
    %v892 = vextract.low.u32 %v891
    %v893 = vextract.high.u32 %v891
    %v894 = vmul.u32 %v887, %v878
    %v895 = vadd.s32 %v890, %v892
    %vm896 = vc.u32 %v890, %v892
    %v897 = vadd.s32 %v893, 1
    %v898 = vsel %vm896, %v897, %v893
    %v899 = vadd.s32 %v894, %v898
    %v900 = vadd.s32 %v899, 536870912
    %v901 = vshrl.u32 %v900, 30
    %v902 = vshll.u32 %v901, 30
    %v903 = vsub.s32 %v899, %v902
    %vm904 = vcmp.lt.s32.totalorder %v903, 0
    %v905 = vsub.s32 0, %v903
    %v906 = vsel %vm904, %v905, %v903
    %v907 = vclz %v906
    %v908 = vsub.s32 %v907, 2
    %vm909 = vcmp.gt.s32.totalorder 0, %v908
    %v910 = vsel %vm909, 0, %v908
    %v911 = vsub.s32 32, %v910
    %v912 = vshll.u32 %v903, %v910
    %v913 = vshrl.u32 %v895, %v911
    %v914 = vor.u32 %v912, %v913
    %v915 = vsub.s32 4294967266, %v910
    %v916 = vadd.s32 %v915, 127
    %v917 = vshll.u32 %v916, 23
    %v918 = vor.u32 4788187, %v917
    %v919 = vand.u32 2147483647, %v918
    %v921 = vcvt.s32.f32 %v914
    %v922 = vmul.f32 %v921, %v919
    %v923 = vxor.u32 %v922, 2147483648
    %v924 = vsel %vm841, %v923, %v922
    %v925 = vsub.s32 4, %v901
    %v926 = vsel %vm841, %v925, %v901
    %v927 = vsel %vm840, %v322, %v924
    %v928 = vsel %vm840, 0, %v926
    %v929 = vcosq.f32.pop %v927
    %v930 = vsinq.f32.pop %v927
    %vm931 = vweird.f32 %v322
    %v932 = vand.u32 %v928, 3
    %vm933 = vcmp.lt.s32.totalorder %v932, 2
    %vm934 = vcmp.eq.s32.totalorder %v932, 0
    %v935 = vxor.u32 %v930, 2147483648
    %v936 = vsel %vm934, %v929, %v935
    %vm937 = vcmp.eq.s32.totalorder %v932, 2
    %v938 = vxor.u32 %v929, 2147483648
    %v939 = vsel %vm937, %v938, %v930
    %v940 = vsel %vm933, %v936, %v939
    %v941 = vsel %vm931, nan, %v940
    %v942 = vand.u32 2147483647, %v323
    %vm943 = vcmp.le.f32.partialorder %v942, 0.7853982
    %vm944 = vcmp.lt.s32.totalorder %v323, 0
    %v945 = vand.u32 %v323, 2139095040
    %v946 = vshrl.u32 %v945, 23
    %v947 = vsub.s32 %v946, 127
    %v948 = vand.u32 2147483647, %v323
    %v949 = vand.u32 %v948, 8388607
    %v950 = vor.u32 %v949, 8388608
    %v951 = vsub.s32 0, %v950
    %v952 = vadd.s32 %v947, 1
    %vm953 = vcmp.gt.s32.totalorder %v952, 0
    %v954 = vsel %vm953, %v952, 0
    %v955 = vshrl.u32 %v954, 5
    %v956 = vand.u32 %v954, 31
    %v957 = vsub.s32 32, %v956
    %v958 = vshrl.u32 683565275, %v957
    %v959 = vshll.u32 683565275, %v956
    %v960 = vshrl.u32 2475754826, %v957
    %v961 = vor.u32 %v959, %v960
    %v962 = vshll.u32 2475754826, %v956
    %v963 = vshrl.u32 2131351028, %v957
    %v964 = vor.u32 %v962, %v963
    %v965 = vshll.u32 2131351028, %v956
    %v966 = vshrl.u32 2102212464, %v957
    %v967 = vor.u32 %v965, %v966
    %v968 = vshll.u32 2102212464, %v956
    %v969 = vshrl.u32 920167782, %v957
    %v970 = vor.u32 %v968, %v969
    %v971 = vshll.u32 920167782, %v956
    %v972 = vshrl.u32 1326507024, %v957
    %v973 = vor.u32 %v971, %v972
    %vm974 = vcmp.lt.s32.totalorder %v955, 1
    %vm975 = vcmp.lt.s32.totalorder %v955, 2
    %vm976 = vcmp.lt.s32.totalorder %v955, 3
    %vm977 = vcmp.lt.s32.totalorder %v955, 4
    %v978 = vsel %vm974, %v958, %v961
    %v979 = vsel %vm977, %v967, 2102212464
    %v980 = vsel %vm976, %v964, %v979
    %v981 = vsel %vm975, %v978, %v980
    %v982 = vsel %vm974, %v961, %v964
    %v983 = vsel %vm977, %v970, 920167782
    %v984 = vsel %vm976, %v967, %v983
    %v985 = vsel %vm975, %v982, %v984
    %v986 = vsel %vm974, %v964, %v967
    %v987 = vsel %vm977, %v973, 1326507024
    %v988 = vsel %vm976, %v970, %v987
    %v989 = vsel %vm975, %v986, %v988
    %v990 = vshll.u32 %v950, 8
    %v991 = vmul.u32.u64.compose %v990, %v989
    %v992 = vextract.low.u32 %v991
    %v993 = vextract.high.u32 %v991
    %v994 = vmul.u32.u64.compose %v990, %v985
    %v995 = vextract.low.u32 %v994
    %v996 = vextract.high.u32 %v994
    %v997 = vmul.u32 %v990, %v981
    %v998 = vadd.s32 %v993, %v995
    %vm999 = vc.u32 %v993, %v995
    %v1000 = vadd.s32 %v996, 1
    %v1001 = vsel %vm999, %v1000, %v996
    %v1002 = vadd.s32 %v997, %v1001
    %v1003 = vadd.s32 %v1002, 536870912
    %v1004 = vshrl.u32 %v1003, 30
    %v1005 = vshll.u32 %v1004, 30
    %v1006 = vsub.s32 %v1002, %v1005
    %vm1007 = vcmp.lt.s32.totalorder %v1006, 0
    %v1008 = vsub.s32 0, %v1006
    %v1009 = vsel %vm1007, %v1008, %v1006
    %v1010 = vclz %v1009
    %v1011 = vsub.s32 %v1010, 2
    %vm1012 = vcmp.gt.s32.totalorder 0, %v1011
    %v1013 = vsel %vm1012, 0, %v1011
    %v1014 = vsub.s32 32, %v1013
    %v1015 = vshll.u32 %v1006, %v1013
    %v1016 = vshrl.u32 %v998, %v1014
    %v1017 = vor.u32 %v1015, %v1016
    %v1018 = vsub.s32 4294967266, %v1013
    %v1019 = vadd.s32 %v1018, 127
    %v1020 = vshll.u32 %v1019, 23
    %v1021 = vor.u32 4788187, %v1020
    %v1022 = vand.u32 2147483647, %v1021
    %v1024 = vcvt.s32.f32 %v1017
    %v1025 = vmul.f32 %v1024, %v1022
    %v1026 = vxor.u32 %v1025, 2147483648
    %v1027 = vsel %vm944, %v1026, %v1025
    %v1028 = vsub.s32 4, %v1004
    %v1029 = vsel %vm944, %v1028, %v1004
    %v1030 = vsel %vm943, %v323, %v1027
    %v1031 = vsel %vm943, 0, %v1029
    %v1032 = vcosq.f32.pop %v1030
    %v1033 = vsinq.f32.pop %v1030
    %vm1034 = vweird.f32 %v323
    %v1035 = vand.u32 %v1031, 3
    %vm1036 = vcmp.lt.s32.totalorder %v1035, 2
    %vm1037 = vcmp.eq.s32.totalorder %v1035, 0
    %v1038 = vxor.u32 %v1033, 2147483648
    %v1039 = vsel %vm1037, %v1032, %v1038
    %vm1040 = vcmp.eq.s32.totalorder %v1035, 2
    %v1041 = vxor.u32 %v1032, 2147483648
    %v1042 = vsel %vm1040, %v1041, %v1033
    %v1043 = vsel %vm1036, %v1039, %v1042
    %v1044 = vsel %vm1034, nan, %v1043
    %v1045 = vadd.f32 %v426, 1.0
    %v1046 = vadd.f32 %v529, 1.0
    %v1047 = vadd.f32 %v632, 1.0
    %v1048 = vadd.f32 %v735, 1.0
    %v1049 = vadd.f32 %v838, 1.0
    %v1050 = vadd.f32 %v941, 1.0
    %v1051 = vadd.f32 %v1044, 1.0
    %vm1052 = vcmp.gt.f32.partialorder %v278, -5.0
    %vm1053 = vcmp.gt.f32.partialorder %v283, -5.0
    %vm1054 = vcmp.gt.f32.partialorder %v288, -5.0
    %vm1055 = vcmp.gt.f32.partialorder %v293, -5.0
    %vm1056 = vcmp.gt.f32.partialorder %v298, -5.0
    %vm1057 = vcmp.gt.f32.partialorder %v303, -5.0
    %vm1058 = vcmp.gt.f32.partialorder %v308, -5.0
    %v1059 = vsel %vm1052, %v1045, 0.0
    %v1060 = vsel %vm1053, %v1046, 0.0
    %v1061 = vsel %vm1054, %v1047, 0.0
    %v1062 = vsel %vm1055, %v1048, 0.0
    %v1063 = vsel %vm1056, %v1049, 0.0
    %v1064 = vsel %vm1057, %v1050, 0.0
    %v1065 = vsel %vm1058, %v1051, 0.0
    %v1066 = vmul.f32 %v278, 1.442695
    %v1067 = vpow.pop %v1066
    %v1068 = vmul.f32 %v283, 1.442695
    %v1069 = vpow.pop %v1068
    %v1070 = vmul.f32 %v288, 1.442695
    %v1071 = vpow.pop %v1070
    %v1072 = vmul.f32 %v293, 1.442695
    %v1073 = vpow.pop %v1072
    %v1074 = vmul.f32 %v298, 1.442695
    %v1075 = vpow.pop %v1074
    %v1076 = vmul.f32 %v303, 1.442695
    %v1077 = vpow.pop %v1076
    %v1078 = vmul.f32 %v308, 1.442695
    %v1079 = vpow.pop %v1078
    %v1080 = vmul.f32 %v1067, 16.108538
    %v1081 = vmul.f32 %v1069, 16.108538
    %v1082 = vmul.f32 %v1071, 16.108538
    %v1083 = vmul.f32 %v1073, 16.108538
    %v1084 = vmul.f32 %v1075, 16.108538
    %v1085 = vmul.f32 %v1077, 16.108538
    %v1086 = vmul.f32 %v1079, 16.108538
    %v1087 = vsub.f32 %v1080, %v316
    %v1088 = vsub.f32 %v1081, %v316
    %v1089 = vsub.f32 %v1082, %v316
    %v1090 = vsub.f32 %v1083, %v316
    %v1091 = vsub.f32 %v1084, %v316
    %v1092 = vsub.f32 %v1085, %v316
    %v1093 = vsub.f32 %v1086, %v316
    %v1094 = vmul.f32 %v1087, %v1087
    %v1095 = vmul.f32 %v1088, %v1088
    %v1096 = vmul.f32 %v1089, %v1089
    %v1097 = vmul.f32 %v1090, %v1090
    %v1098 = vmul.f32 %v1091, %v1091
    %v1099 = vmul.f32 %v1092, %v1092
    %v1100 = vmul.f32 %v1093, %v1093
    %v1101 = vsub.f32 -0.6931472, %v1094
    %v1102 = vsub.f32 -0.6931472, %v1095
    %v1103 = vsub.f32 -0.6931472, %v1096
    %v1104 = vsub.f32 -0.6931472, %v1097
    %v1105 = vsub.f32 -0.6931472, %v1098
    %v1106 = vsub.f32 -0.6931472, %v1099
    %v1107 = vsub.f32 -0.6931472, %v1100
    %v1108 = vmul.f32 %v1101, 1.442695
    %v1109 = vpow.pop %v1108
    %v1110 = vmul.f32 %v1102, 1.442695
    %v1111 = vpow.pop %v1110
    %v1112 = vmul.f32 %v1103, 1.442695
    %v1113 = vpow.pop %v1112
    %v1114 = vmul.f32 %v1104, 1.442695
    %v1115 = vpow.pop %v1114
    %v1116 = vmul.f32 %v1105, 1.442695
    %v1117 = vpow.pop %v1116
    %v1118 = vmul.f32 %v1106, 1.442695
    %v1119 = vpow.pop %v1118
    %v1120 = vmul.f32 %v1107, 1.442695
    %v1121 = vpow.pop %v1120
    %v1122 = vmul.f32 %v1059, %v1109
    %v1123 = vmul.f32 %v1060, %v1111
    %v1124 = vmul.f32 %v1061, %v1113
    %v1125 = vmul.f32 %v1062, %v1115
    %v1126 = vmul.f32 %v1063, %v1117
    %v1127 = vmul.f32 %v1064, %v1119
    %v1128 = vmul.f32 %v1065, %v1121
    %1129 = vst [vmem:[#allocation7] sm:$0xff] %v1122
    %1130 = vst [vmem:[#allocation7 + $0x8] sm:$0xff] %v1123
    %1131 = vst [vmem:[#allocation7 + $0x10] sm:$0xff] %v1124
    %1132 = vst [vmem:[#allocation7 + $0x18] sm:$0xff] %v1125
    %1133 = vst [vmem:[#allocation7 + $0x20] sm:$0xff] %v1126
    %1134 = vst [vmem:[#allocation7 + $0x28] sm:$0xff] %v1127
    %1135 = vst [vmem:[#allocation7 + $0x30] sm:$0xff] %v1128
    // Predicated region
    $region18: #{tpu_custom_call.1} parent=1 // pred_check
      _
    $region19: #{tpu_custom_call.1} parent=1 // pred_check_branch
      %1137 = sbr.rel (0) target = $region21
    $region20: #{tpu_custom_call.1} parent=1 // pred_region
      %s1139 = ssub.s32 896, 896
      %1140 = vsyncadd [#allocation4], %s1139
      %s1141 = sshll.u32 [#allocation7], 4
      %s1142 = int_to_ptr.vmem [resolvable:$true] %s1141
      %1147 = dma.vmem_to_hbm [thread:$0]  %s1142, 896, %s2, [#allocation4], 128, 128, 8
    $region21: #{tpu_custom_call.1} parent=1 // pred_fallthru
      _
    // Predicated region
    $region22: #{tpu_custom_call.1} parent=1 // pred_check
      _
    $region23: #{tpu_custom_call.1} parent=1 // pred_check_branch
      %1149 = sbr.rel (0) target = $region25
    $region24: #{tpu_custom_call.1} parent=1 // pred_region
      %1150 = dma.done [#allocation4], 896
    $region25: #{tpu_custom_call.1} parent=1 // pred_fallthru
      _
    %1151 = vsyncpa [#allocation3], 1
    %1152 = vsyncpa [#allocation6], 1
    %1153 = vsyncpa [#allocation4], 1

</llo_original>
